<compile_context>
chip_gen: v5e
topology: v5e:2x2
jax: 0.10.0
libtpu: 0.0.40
codegen_flags: <defaults>
</compile_context>

<pallas_src>
import jax
import jax.numpy as jnp
from jax.experimental import pallas as pl
from jax.experimental.pallas import tpu as pltpu

IN_F = 9
OUT_F = 3
LANE = 128
MAX_TB = 2048  # batch lanes per grid step


def linear_kernel(xt_ref, w_ref, b_ref, ot_ref):
    # xt_ref: (IN_F, TB)  -- batch on lanes (fast axis)
    # w_ref : (OUT_F, IN_F) PyTorch layout
    # b_ref : (OUT_F, 1)
    # ot_ref: (OUT_F, TB)
    xt = xt_ref[...]
    w = w_ref[...]
    b = b_ref[...]
    tb = xt.shape[1]

    # Bias broadcast hoisted out of the unrolled loop (JAX does not CSE
    # broadcast_in_dim, so do it exactly once).
    acc = jnp.broadcast_to(b, (OUT_F, tb)).astype(jnp.float32)

    # Unrolled K=9 contraction on the VPU: 9 outer-product FMAs,
    # acc[o, :] += w[o, k] * x[k, :].  Static slices on Refs/arrays of this
    # size are free; everything stays in a handful of vregs.
    for k in range(IN_F):
        acc = acc + w[:, k:k + 1] * xt[k:k + 1, :]

    ot_ref[...] = acc.astype(ot_ref.dtype)


def _batch_tile(b):
    # Lane-dense batch tile: a multiple of 128 lanes, capped at MAX_TB.
    return max(LANE, pl.cdiv(min(b, MAX_TB), LANE) * LANE)


def pack_params(weight, bias):
    """Pre-bake parameter layout once (outside the per-call hot path).

    weight stays (out_f, in_f) -- exactly what the kernel consumes;
    bias is reshaped to a (out_f, 1) column.
    """
    w = jnp.asarray(weight, jnp.float32)
    b = jnp.asarray(bias, jnp.float32).reshape(OUT_F, 1)
    return w, b


@jax.jit
def neural_network_forward(x, weight, bias_col):
    """Equivalent of NeuralNetwork.forward: nn.Linear(9, 3).

    x: (B, 9) float32, weight: (3, 9), bias_col: (3, 1) (see pack_params).
    Returns (B, 3).
    """
    B = x.shape[0]
    TB = _batch_tile(B)
    Bp = pl.cdiv(B, TB) * TB

    # Layout plumbing in the wrapper (once per call): batch -> lane dimension,
    # padded to a whole number of lane-dense tiles.
    xt = x.T  # (IN_F, B)
    if Bp != B:
        xt = jnp.pad(xt, ((0, 0), (0, Bp - B)))

    out_t = pl.pallas_call(
        linear_kernel,
        out_shape=jax.ShapeDtypeStruct((OUT_F, Bp), x.dtype),
        grid=(Bp // TB,),
        in_specs=[
            # x tile: sublane dim = 9 (== full array dim, allowed), lane dim =
            # TB (multiple of 128) -> unmasked vector loads.
            pl.BlockSpec((IN_F, TB), lambda i: (0, i)),
            # Tiny weight/bias blocks are grid-invariant -> stay resident in
            # VMEM across grid steps.
            pl.BlockSpec((OUT_F, IN_F), lambda i: (0, 0)),
            pl.BlockSpec((OUT_F, 1), lambda i: (0, 0)),
        ],
        out_specs=pl.BlockSpec((OUT_F, TB), lambda i: (0, i)),
        compiler_params=pltpu.CompilerParams(
            dimension_semantics=("parallel",)),  # dual-TC sharding on v7x
    )(xt, weight, bias_col)

    # Drop batch padding, restore (B, out_f).
    return out_t[:, :B].T


def init_params(key, in_features=IN_F, out_features=OUT_F):
    # Deterministic PyTorch-style init: U(-1/sqrt(in), 1/sqrt(in))
    kw, kb = jax.random.split(key)
    bound = 1.0 / jnp.sqrt(float(in_features))
    weight = jax.random.uniform(
        kw, (out_features, in_features), jnp.float32, -bound, bound)
    bias = jax.random.uniform(
        kb, (out_features,), jnp.float32, -bound, bound)
    return weight, bias


if __name__ == "__main__":
    key = jax.random.PRNGKey(0)
    k_x, k_p = jax.random.split(key)

    weight, bias = init_params(k_p)
    w_packed, b_packed = pack_params(weight, bias)

    # Two batch sizes: a tiny one (pads to a single 128-lane tile) and one that
    # exercises a multi-step pipelined grid (2304 -> two 2048-lane tiles).
    for B in (8, 2304):
        kx = jax.random.fold_in(k_x, B)
        x = jax.random.normal(kx, (B, IN_F), dtype=jnp.float32)

        out = jax.block_until_ready(neural_network_forward(x, w_packed, b_packed))

        ref = x @ weight.T + bias
        assert out.shape == (B, OUT_F)
        assert jnp.allclose(out, ref, atol=1e-5, rtol=1e-5)

    print("KERNEL_OK")
</pallas_src>

<mosaic_0001>
module attributes {stable_mosaic.version = 11 : i64} {
  func.func @linear_kernel(%arg0: i32, %arg1: memref<9x128xf32, #tpu.memory_space<vmem>>, %arg2: memref<3x9xf32, #tpu.memory_space<vmem>>, %arg3: memref<3x1xf32, #tpu.memory_space<vmem>>, %arg4: memref<3x128xf32, #tpu.memory_space<vmem>>) attributes {dimension_semantics = [#tpu.dimension_semantics<parallel>], iteration_bounds = array<i64: 1>, scalar_prefetch = 0 : i64, scratch_operands = 0 : i64, tpu.core_type = #tpu.core_type<tc>, window_params = [{transform_indices = @transform_0, window_bounds = array<i64: 9, 128>}, {pipeline_mode = #tpu.pipeline_mode<synchronous>, transform_indices = @transform_1, window_bounds = array<i64: 3, 9>}, {pipeline_mode = #tpu.pipeline_mode<synchronous>, transform_indices = @transform_2, window_bounds = array<i64: 3, 1>}, {transform_indices = @transform_3, window_bounds = array<i64: 3, 128>}]} {
    %c0 = arith.constant 0 : index
    %c0_0 = arith.constant 0 : index
    %0 = vector.load %arg1[%c0, %c0_0] : memref<9x128xf32, #tpu.memory_space<vmem>>, vector<9x128xf32>
    %c0_1 = arith.constant 0 : index
    %c0_2 = arith.constant 0 : index
    %1 = vector.load %arg2[%c0_1, %c0_2] : memref<3x9xf32, #tpu.memory_space<vmem>>, vector<3x9xf32>
    %c0_3 = arith.constant 0 : index
    %c0_4 = arith.constant 0 : index
    %2 = vector.load %arg3[%c0_3, %c0_4] : memref<3x1xf32, #tpu.memory_space<vmem>>, vector<3x1xf32>
    %3 = vector.shape_cast %2 : vector<3x1xf32> to vector<3x1xf32>
    %4 = vector.broadcast %3 : vector<3x1xf32> to vector<3x128xf32>
    %5 = vector.extract_strided_slice %1 {offsets = [0, 0], sizes = [3, 1], strides = [1, 1]} : vector<3x9xf32> to vector<3x1xf32>
    %6 = vector.extract_strided_slice %0 {offsets = [0, 0], sizes = [1, 128], strides = [1, 1]} : vector<9x128xf32> to vector<1x128xf32>
    %7 = vector.broadcast %5 : vector<3x1xf32> to vector<3x128xf32>
    %8 = vector.broadcast %6 : vector<1x128xf32> to vector<3x128xf32>
    %9 = arith.mulf %7, %8 : vector<3x128xf32>
    %10 = arith.addf %4, %9 : vector<3x128xf32>
    %11 = vector.extract_strided_slice %1 {offsets = [0, 1], sizes = [3, 1], strides = [1, 1]} : vector<3x9xf32> to vector<3x1xf32>
    %12 = vector.extract_strided_slice %0 {offsets = [1, 0], sizes = [1, 128], strides = [1, 1]} : vector<9x128xf32> to vector<1x128xf32>
    %13 = vector.broadcast %11 : vector<3x1xf32> to vector<3x128xf32>
    %14 = vector.broadcast %12 : vector<1x128xf32> to vector<3x128xf32>
    %15 = arith.mulf %13, %14 : vector<3x128xf32>
    %16 = arith.addf %10, %15 : vector<3x128xf32>
    %17 = vector.extract_strided_slice %1 {offsets = [0, 2], sizes = [3, 1], strides = [1, 1]} : vector<3x9xf32> to vector<3x1xf32>
    %18 = vector.extract_strided_slice %0 {offsets = [2, 0], sizes = [1, 128], strides = [1, 1]} : vector<9x128xf32> to vector<1x128xf32>
    %19 = vector.broadcast %17 : vector<3x1xf32> to vector<3x128xf32>
    %20 = vector.broadcast %18 : vector<1x128xf32> to vector<3x128xf32>
    %21 = arith.mulf %19, %20 : vector<3x128xf32>
    %22 = arith.addf %16, %21 : vector<3x128xf32>
    %23 = vector.extract_strided_slice %1 {offsets = [0, 3], sizes = [3, 1], strides = [1, 1]} : vector<3x9xf32> to vector<3x1xf32>
    %24 = vector.extract_strided_slice %0 {offsets = [3, 0], sizes = [1, 128], strides = [1, 1]} : vector<9x128xf32> to vector<1x128xf32>
    %25 = vector.broadcast %23 : vector<3x1xf32> to vector<3x128xf32>
    %26 = vector.broadcast %24 : vector<1x128xf32> to vector<3x128xf32>
    %27 = arith.mulf %25, %26 : vector<3x128xf32>
    %28 = arith.addf %22, %27 : vector<3x128xf32>
    %29 = vector.extract_strided_slice %1 {offsets = [0, 4], sizes = [3, 1], strides = [1, 1]} : vector<3x9xf32> to vector<3x1xf32>
    %30 = vector.extract_strided_slice %0 {offsets = [4, 0], sizes = [1, 128], strides = [1, 1]} : vector<9x128xf32> to vector<1x128xf32>
    %31 = vector.broadcast %29 : vector<3x1xf32> to vector<3x128xf32>
    %32 = vector.broadcast %30 : vector<1x128xf32> to vector<3x128xf32>
    %33 = arith.mulf %31, %32 : vector<3x128xf32>
    %34 = arith.addf %28, %33 : vector<3x128xf32>
    %35 = vector.extract_strided_slice %1 {offsets = [0, 5], sizes = [3, 1], strides = [1, 1]} : vector<3x9xf32> to vector<3x1xf32>
    %36 = vector.extract_strided_slice %0 {offsets = [5, 0], sizes = [1, 128], strides = [1, 1]} : vector<9x128xf32> to vector<1x128xf32>
    %37 = vector.broadcast %35 : vector<3x1xf32> to vector<3x128xf32>
    %38 = vector.broadcast %36 : vector<1x128xf32> to vector<3x128xf32>
    %39 = arith.mulf %37, %38 : vector<3x128xf32>
    %40 = arith.addf %34, %39 : vector<3x128xf32>
    %41 = vector.extract_strided_slice %1 {offsets = [0, 6], sizes = [3, 1], strides = [1, 1]} : vector<3x9xf32> to vector<3x1xf32>
    %42 = vector.extract_strided_slice %0 {offsets = [6, 0], sizes = [1, 128], strides = [1, 1]} : vector<9x128xf32> to vector<1x128xf32>
    %43 = vector.broadcast %41 : vector<3x1xf32> to vector<3x128xf32>
    %44 = vector.broadcast %42 : vector<1x128xf32> to vector<3x128xf32>
    %45 = arith.mulf %43, %44 : vector<3x128xf32>
    %46 = arith.addf %40, %45 : vector<3x128xf32>
    %47 = vector.extract_strided_slice %1 {offsets = [0, 7], sizes = [3, 1], strides = [1, 1]} : vector<3x9xf32> to vector<3x1xf32>
    %48 = vector.extract_strided_slice %0 {offsets = [7, 0], sizes = [1, 128], strides = [1, 1]} : vector<9x128xf32> to vector<1x128xf32>
    %49 = vector.broadcast %47 : vector<3x1xf32> to vector<3x128xf32>
    %50 = vector.broadcast %48 : vector<1x128xf32> to vector<3x128xf32>
    %51 = arith.mulf %49, %50 : vector<3x128xf32>
    %52 = arith.addf %46, %51 : vector<3x128xf32>
    %53 = vector.extract_strided_slice %1 {offsets = [0, 8], sizes = [3, 1], strides = [1, 1]} : vector<3x9xf32> to vector<3x1xf32>
    %54 = vector.extract_strided_slice %0 {offsets = [8, 0], sizes = [1, 128], strides = [1, 1]} : vector<9x128xf32> to vector<1x128xf32>
    %55 = vector.broadcast %53 : vector<3x1xf32> to vector<3x128xf32>
    %56 = vector.broadcast %54 : vector<1x128xf32> to vector<3x128xf32>
    %57 = arith.mulf %55, %56 : vector<3x128xf32>
    %58 = arith.addf %52, %57 : vector<3x128xf32>
    %c0_5 = arith.constant 0 : index
    %c0_6 = arith.constant 0 : index
    %59 = vector.load %arg4[%c0_5, %c0_6] : memref<3x128xf32, #tpu.memory_space<vmem>>, vector<3x128xf32>
    tpu.vector_store %arg4[%c0_5, %c0_6], %58 {strides = array<i32>} : memref<3x128xf32, #tpu.memory_space<vmem>>, vector<3x128xf32>,
    return
  }
  func.func @transform_0(%arg0: i32) -> (i32, i32) {
    %c0_i32 = arith.constant 0 : i32
    %c0_i32_0 = arith.constant 0 : i32
    return %c0_i32, %arg0 : i32, i32
  }
  func.func @transform_1(%arg0: i32) -> (i32, i32) {
    %c0_i32 = arith.constant 0 : i32
    %c0_i32_0 = arith.constant 0 : i32
    %c0_i32_1 = arith.constant 0 : i32
    return %c0_i32, %c0_i32_0 : i32, i32
  }
  func.func @transform_2(%arg0: i32) -> (i32, i32) {
    %c0_i32 = arith.constant 0 : i32
    %c0_i32_0 = arith.constant 0 : i32
    %c0_i32_1 = arith.constant 0 : i32
    return %c0_i32, %c0_i32_0 : i32, i32
  }
  func.func @transform_3(%arg0: i32) -> (i32, i32) {
    %c0_i32 = arith.constant 0 : i32
    %c0_i32_0 = arith.constant 0 : i32
    return %c0_i32, %arg0 : i32, i32
  }
}

</mosaic_0001>

<llo_original>
// kernel: neural_network_forward.1
$region0: #{neural_network_forward.1}
  #allocation0 [shape = 'u32[]', space=smem, size = 0x4, offset = 0x4, fixed_abs, tag = 'smem constant byte address 0x4 - core index']
  #allocation1 [shape = 'u32[72,128]{1,0:T(1,128)}', space=vmem, size = 0x9000, scoped, tag = 'internal scratch']
  %s0 = inlined_call_operand.vmem [shape: f32[9,128], index: 0, kind: input, shape index: {}]
  %s1 = inlined_call_operand.vmem [shape: f32[3,9], index: 1, kind: input, shape index: {}]
  %s2 = inlined_call_operand.vmem [shape: f32[3,1], index: 2, kind: input, shape index: {}]
  %s3 = inlined_call_operand.vmem [shape: f32[3,128], index: 3, kind: output, shape index: {}]
  %s4 = sld [smem:[#allocation0]]
  $region22: #{neural_network_forward.1} parent=0
    _
  %s6 = ssub.s32 1, %s4
  %s7 = scalar_select 0, %s6, %s4
  // Predicated region
  $region2: #{neural_network_forward.1} parent=0 // pred_check
    _
  $region3: #{neural_network_forward.1} parent=0 // pred_check_branch
    %9 = sbr.rel (0) target = $region5
  $region4: #{neural_network_forward.1} parent=0 // pred_region
    _
  $region5: #{neural_network_forward.1} parent=0 // pred_fallthru
    _
  // Predicated region
  $region6: #{neural_network_forward.1} parent=0 // pred_check
    _
  $region7: #{neural_network_forward.1} parent=0 // pred_check_branch
    %11 = sbr.rel (0) target = $region9
  $region8: #{neural_network_forward.1} parent=0 // pred_region
    _
  $region9: #{neural_network_forward.1} parent=0 // pred_fallthru
    _
  // Predicated region
  $region10: #{neural_network_forward.1} parent=0 // pred_check
    _
  $region11: #{neural_network_forward.1} parent=0 // pred_check_branch
    %13 = sbr.rel (0) target = $region13
  $region12: #{neural_network_forward.1} parent=0 // pred_region
    _
  $region13: #{neural_network_forward.1} parent=0 // pred_fallthru
    _
  %v14 = vld [vmem:[%s0] sm:$0xff]
  %v15 = vld [vmem:[%s0 + $0x8] sm:$0x1]
  %v16 = vld [vmem:[%s1] sm:$0x7]
  %v17 = vld [vmem:[%s2] sm:$0x7]
  %19 = vset.pattern.permute.xlu0 0
  %20 = vperm.xlu0 %19, %v17
  %v21 = vpop.permute.xlu0 %20
  %24 = vset.pattern.permute.xlu0 0
  %25 = vperm.xlu0 %24, %v16
  %v26 = vpop.permute.xlu0 %25
  %v28 = vperm.slane %v14, 0
  %v29 = vmul.f32 %v26, %v28
  %v30 = vadd.f32 %v21, %v29
  %31 = vset.pattern.permute.xlu0 1
  %32 = vperm.xlu0 %31, %v16
  %v33 = vpop.permute.xlu0 %32
  %v35 = vperm.slane %v14, 1
  %v36 = vmul.f32 %v33, %v35
  %v37 = vadd.f32 %v30, %v36
  %38 = vset.pattern.permute.xlu0 2
  %39 = vperm.xlu0 %38, %v16
  %v40 = vpop.permute.xlu0 %39
  %v42 = vperm.slane %v14, 2
  %v43 = vmul.f32 %v40, %v42
  %v44 = vadd.f32 %v37, %v43
  %45 = vset.pattern.permute.xlu0 3
  %46 = vperm.xlu0 %45, %v16
  %v47 = vpop.permute.xlu0 %46
  %v49 = vperm.slane %v14, 3
  %v50 = vmul.f32 %v47, %v49
  %v51 = vadd.f32 %v44, %v50
  %52 = vset.pattern.permute.xlu0 4
  %53 = vperm.xlu0 %52, %v16
  %v54 = vpop.permute.xlu0 %53
  %v56 = vperm.slane %v14, 4
  %v57 = vmul.f32 %v54, %v56
  %v58 = vadd.f32 %v51, %v57
  %59 = vset.pattern.permute.xlu0 5
  %60 = vperm.xlu0 %59, %v16
  %v61 = vpop.permute.xlu0 %60
  %v63 = vperm.slane %v14, 5
  %v64 = vmul.f32 %v61, %v63
  %v65 = vadd.f32 %v58, %v64
  %66 = vset.pattern.permute.xlu0 6
  %67 = vperm.xlu0 %66, %v16
  %v68 = vpop.permute.xlu0 %67
  %v70 = vperm.slane %v14, 6
  %v71 = vmul.f32 %v68, %v70
  %v72 = vadd.f32 %v65, %v71
  %73 = vset.pattern.permute.xlu0 7
  %74 = vperm.xlu0 %73, %v16
  %v75 = vpop.permute.xlu0 %74
  %v77 = vperm.slane %v14, 7
  %v78 = vmul.f32 %v75, %v77
  %v79 = vadd.f32 %v72, %v78
  %80 = vset.pattern.permute.xlu0 8
  %81 = vperm.xlu0 %80, %v16
  %v82 = vpop.permute.xlu0 %81
  %v84 = vperm.slane %v15, 0
  %v85 = vmul.f32 %v82, %v84
  %v86 = vadd.f32 %v79, %v85
  %87 = vst [vmem:[%s3] sm:$0x7] %v86
  // Predicated region
  $region14: #{neural_network_forward.1} parent=0 // pred_check
    _
  $region15: #{neural_network_forward.1} parent=0 // pred_check_branch
    %89 = sbr.rel (0) target = $region17
  $region16: #{neural_network_forward.1} parent=0 // pred_region
    _
  $region17: #{neural_network_forward.1} parent=0 // pred_fallthru
    _
  // Predicated region
  $region18: #{neural_network_forward.1} parent=0 // pred_check
    _
  $region19: #{neural_network_forward.1} parent=0 // pred_check_branch
    %91 = sbr.rel (0) target = $region21
  $region20: #{neural_network_forward.1} parent=0 // pred_region
    _
  $region21: #{neural_network_forward.1} parent=0 // pred_fallthru
    _

</llo_original>
